<compile_context>
chip_gen: v5e
topology: v5e:2x2
jax: 0.10.0
libtpu: 0.0.40
codegen_flags: <defaults>
</compile_context>

<pallas_src>
import jax
import jax.numpy as jnp
from jax.experimental import pallas as pl
from jax.experimental.pallas import tpu as pltpu

LANES = 128                           # vreg lane width
TARGET_BLOCK_BYTES = 4 * 1024 * 1024  # ~4 MiB per block (VMEM footprint)
MAX_BLOCK_BYTES = 8 * 1024 * 1024     # hard cap for the no-pad unaligned path
SMALL_BYTES = 512 * 1024              # below this: single block, single step
MIN_STEPS = 4                         # >=4 steps -> both v7x TCs + overlap
VMEM_LIMIT_BYTES = 32 * 1024 * 1024   # raises v5e's 16 MiB scoped default;
                                      # default on v6e/v7x; < v7x 64 MiB phys


def _quad_relu_kernel(x_ref, o_ref):
    x = x_ref[...]
    mask = (x > 0).astype(x.dtype)                      # tmp.float()
    o_ref[...] = (mask * x * x).astype(o_ref.dtype)     # tmp.float() * x**2


def _cdiv(a: int, b: int) -> int:
    return -(-a // b)


def _round_up(a: int, b: int) -> int:
    return _cdiv(a, b) * b


def _sublane(dtype) -> int:
    # 8 for 4-byte dtypes, 16 for bf16/f16, 32 for int8/fp8 (sublane packing).
    return max(8, 32 // jnp.dtype(dtype).itemsize)


def _pick_block_rows(rows: int, row_bytes_vmem: int, dtype) -> tuple[int, int]:
    """Pick (block_rows, num_grid_steps) for a (rows, width) slab."""
    sub = _sublane(dtype)
    total_bytes = rows * row_bytes_vmem
    if total_bytes <= SMALL_BYTES or rows <= sub:
        # Tiny: one full-array block (block == full dims, so any row count ok).
        return rows, 1
    # Biggest block that stays near TARGET_BLOCK_BYTES ...
    by_bytes = max(sub, (TARGET_BLOCK_BYTES // row_bytes_vmem) // sub * sub)
    # ... but never fewer than MIN_STEPS grid steps (pipelining / 2 TCs).
    by_steps = _round_up(_cdiv(rows, MIN_STEPS), sub)
    block_rows = max(sub, min(by_bytes, by_steps))
    return block_rows, _cdiv(rows, block_rows)


def _quad_relu_2d(arr2d: jax.Array, row_bytes_vmem: int) -> jax.Array:
    rows, width = arr2d.shape
    dtype = arr2d.dtype
    block_rows, num_blocks = _pick_block_rows(rows, row_bytes_vmem, dtype)

    return pl.pallas_call(
        _quad_relu_kernel,
        out_shape=jax.ShapeDtypeStruct((rows, width), dtype),
        grid_spec=pltpu.PrefetchScalarGridSpec(
            num_scalar_prefetch=0,
            grid=(num_blocks,),
            in_specs=[pl.BlockSpec((block_rows, width), lambda i: (i, 0))],
            out_specs=pl.BlockSpec((block_rows, width), lambda i: (i, 0)),
        ),
        compiler_params=pltpu.CompilerParams(
            dimension_semantics=("parallel",),
            vmem_limit_bytes=VMEM_LIMIT_BYTES,
        ),
    )(arr2d)


def _quad_relu_padded(x: jax.Array) -> jax.Array:
    # Fallback only for degenerate shapes (huge last dim that is not a
    # multiple of 128 and would not fit VMEM as a full-width block).
    flat = x.reshape(-1)
    n = flat.shape[0]
    pad = (-n) % LANES
    flat = jnp.pad(flat, (0, pad))
    out = quad_relu(flat)            # flat padded length is lane-aligned
    return out[:n].reshape(x.shape)


def quad_relu(x: jax.Array) -> jax.Array:
    """Elementwise QuadReLU via a Pallas TPU kernel. Any shape, float dtype."""
    orig_shape = x.shape
    dtype = x.dtype
    itemsize = jnp.dtype(dtype).itemsize
    n = x.size
    if n == 0:
        return x

    if n % LANES == 0:
        # Lane-dense slab: free reshape, zero padding, fully packed vregs.
        rows, width = n // LANES, LANES
        row_bytes_vmem = LANES * itemsize
    else:
        # No pad/slice HBM round-trips: keep the contiguous last dim as the
        # lane dim.  Block last dim == full array last dim (always legal);
        # only the rows axis uses partial-tail-block masking.
        width = orig_shape[-1] if len(orig_shape) >= 1 else 1
        rows = n // width
        row_bytes_vmem = _round_up(width, LANES) * itemsize
        if _sublane(dtype) * row_bytes_vmem > MAX_BLOCK_BYTES:
            return _quad_relu_padded(x)

    out = _quad_relu_2d(x.reshape(rows, width), row_bytes_vmem)
    return out.reshape(orig_shape)


def quad_relu_ref(x: jax.Array) -> jax.Array:
    """Pure-JAX reference matching the PyTorch forward."""
    return (x > 0.0).astype(x.dtype) * (x ** 2)


if __name__ == "__main__":
    key = jax.random.PRNGKey(0)

    # 1) Small NCHW input consistent with typical conv-net usage of QuadReLU.
    x = jax.random.normal(key, (2, 4, 16, 16), dtype=jnp.float32)
    y = quad_relu(x)
    jax.block_until_ready(y)
    assert y.shape == x.shape and y.dtype == x.dtype
    assert jnp.allclose(y, quad_relu_ref(x), atol=1e-6, rtol=1e-6), "small mismatch"

    # 2) Lane-aligned medium input: exercises the dense multi-block path
    #    (>= MIN_STEPS grid steps, ~4 MiB blocks).
    x_med = jax.random.normal(key, (8, 64, 64, 64), dtype=jnp.float32)
    y_med = quad_relu(x_med)
    jax.block_until_ready(y_med)
    assert jnp.allclose(y_med, quad_relu_ref(x_med), atol=1e-6, rtol=1e-6), "medium mismatch"

    # 3) Non-multiple-of-128 numel: exercises the no-pad unaligned path with a
    #    partial tail block in the rows axis.
    x_big = jax.random.normal(key, (3, 8, 555, 130), dtype=jnp.float32)
    y_big = quad_relu(x_big)
    jax.block_until_ready(y_big)
    assert jnp.allclose(y_big, quad_relu_ref(x_big), atol=1e-6, rtol=1e-6), "unaligned mismatch"

    print("KERNEL_OK")
</pallas_src>

<mosaic_0001>
module attributes {stable_mosaic.version = 11 : i64} {
  func.func @_quad_relu_kernel(%arg0: i32, %arg1: memref<16x128xf32, #tpu.memory_space<vmem>>, %arg2: memref<16x128xf32, #tpu.memory_space<vmem>>) attributes {dimension_semantics = [#tpu.dimension_semantics<parallel>], iteration_bounds = array<i64: 1>, scalar_prefetch = 0 : i64, scratch_operands = 0 : i64, tpu.core_type = #tpu.core_type<tc>, window_params = [{transform_indices = @transform_0, window_bounds = array<i64: 16, 128>}, {transform_indices = @transform_1, window_bounds = array<i64: 16, 128>}]} {
    %c0 = arith.constant 0 : index
    %c0_0 = arith.constant 0 : index
    %0 = vector.load %arg1[%c0, %c0_0] : memref<16x128xf32, #tpu.memory_space<vmem>>, vector<16x128xf32>
    %cst = arith.constant 0.000000e+00 : f32
    %1 = vector.broadcast %cst : f32 to vector<16x128xf32>
    %2 = arith.cmpf ogt, %0, %1 : vector<16x128xf32>
    %3 = arith.extui %2 : vector<16x128xi1> to vector<16x128xi32>
    %4 = arith.sitofp %3 : vector<16x128xi32> to vector<16x128xf32>
    %5 = arith.mulf %4, %0 : vector<16x128xf32>
    %6 = arith.mulf %5, %0 : vector<16x128xf32>
    %c0_1 = arith.constant 0 : index
    %c0_2 = arith.constant 0 : index
    %7 = vector.load %arg2[%c0_1, %c0_2] : memref<16x128xf32, #tpu.memory_space<vmem>>, vector<16x128xf32>
    tpu.vector_store %arg2[%c0_1, %c0_2], %6 {strides = array<i32>} : memref<16x128xf32, #tpu.memory_space<vmem>>, vector<16x128xf32>,
    return
  }
  func.func @transform_0(%arg0: i32) -> (i32, i32) {
    %c0_i32 = arith.constant 0 : i32
    %c0_i32_0 = arith.constant 0 : i32
    return %arg0, %c0_i32 : i32, i32
  }
  func.func @transform_1(%arg0: i32) -> (i32, i32) {
    %c0_i32 = arith.constant 0 : i32
    %c0_i32_0 = arith.constant 0 : i32
    return %arg0, %c0_i32 : i32, i32
  }
}

</mosaic_0001>

<llo_original>
// kernel: tpu_custom_call.1
$region0: #{tpu_custom_call.1}
  #allocation0 [shape = 'u32[]', space=smem, size = 0x4, offset = 0x4, fixed_abs, tag = 'smem constant byte address 0x4 - core index']
  #allocation1 [shape = 'u32[72,128]{1,0:T(1,128)}', space=vmem, size = 0x9000, scoped, tag = 'internal scratch']
  %s0 = inlined_call_operand.hbm [shape: f32[16,128], index: 0, kind: input, shape index: {}]
  %s1 = inlined_call_operand.hbm [shape: f32[16,128], index: 1, kind: output, shape index: {}]
  %s2 = sld [smem:[#allocation0]]
  $region18: #{tpu_custom_call.1} parent=0
    _
  %s4 = ssub.s32 1, %s2
  %s5 = scalar_select 0, %s4, %s2
  $region1: #{tpu_custom_call.1} parent=0
    #allocation2 [shape = 'u8[8192]{0}', space=vmem, size = 0x2000, scoped, tag = 'input window, operand 0, single buffered']
    #allocation3 [shape = 's32[1]{0}', space=sflag, size = 0x4, scoped, tag = 'scoped memory for tpu_custom_call.1']
    #allocation4 [shape = 's32[1]{0}', space=sflag, size = 0x4, scoped, tag = 'scoped memory for tpu_custom_call.1']
    #allocation5 [shape = 'u8[8192]{0}', space=vmem, size = 0x2000, scoped, tag = 'output window, operand 0, single buffered']
    %6 = vsyncpa [#allocation3], 0
    %7 = vsyncpa [#allocation4], 0
    // Predicated region
    $region2: #{tpu_custom_call.1} parent=1 // pred_check
      _
    $region3: #{tpu_custom_call.1} parent=1 // pred_check_branch
      %9 = sbr.rel (0) target = $region5
    $region4: #{tpu_custom_call.1} parent=1 // pred_region
      %11 = vsyncadd [#allocation3], 0
      %s12 = sshll.u32 %s0, 4
      %s13 = int_to_ptr.hbm [resolvable:$true] %s12
      %s14 = sshll.u32 [#allocation2], 4
      %s15 = int_to_ptr.vmem [resolvable:$true] %s14
      %20 = dma.hbm_to_vmem [thread:$0]  %s13, 256, %s15, [#allocation3], 128, 128, 8
    $region5: #{tpu_custom_call.1} parent=1 // pred_fallthru
      _
    // Predicated region
    $region6: #{tpu_custom_call.1} parent=1 // pred_check
      _
    $region7: #{tpu_custom_call.1} parent=1 // pred_check_branch
      %22 = sbr.rel (0) target = $region9
    $region8: #{tpu_custom_call.1} parent=1 // pred_region
      %24 = dma.done [#allocation3], 256
    $region9: #{tpu_custom_call.1} parent=1 // pred_fallthru
      _
    %v25 = vld [vmem:[#allocation2] sm:$0xff]
    %v26 = vld [vmem:[#allocation2 + $0x8] sm:$0xff]
    %vm27 = vcmp.gt.f32.partialorder %v25, 0.0
    %vm28 = vcmp.gt.f32.partialorder %v26, 0.0
    %v29 = vsel %vm27, 1, 0
    %v30 = vsel %vm28, 1, 0
    %v31 = vcvt.s32.f32 %v29
    %v32 = vcvt.s32.f32 %v30
    %v33 = vmul.f32 %v31, %v25
    %v34 = vmul.f32 %v32, %v26
    %v35 = vmul.f32 %v33, %v25
    %v36 = vmul.f32 %v34, %v26
    %37 = vst [vmem:[#allocation5] sm:$0xff] %v35
    %38 = vst [vmem:[#allocation5 + $0x8] sm:$0xff] %v36
    // Predicated region
    $region10: #{tpu_custom_call.1} parent=1 // pred_check
      _
    $region11: #{tpu_custom_call.1} parent=1 // pred_check_branch
      %40 = sbr.rel (0) target = $region13
    $region12: #{tpu_custom_call.1} parent=1 // pred_region
      %42 = vsyncadd [#allocation4], 0
      %s43 = sshll.u32 [#allocation5], 4
      %s44 = int_to_ptr.vmem [resolvable:$true] %s43
      %s45 = sshll.u32 %s1, 4
      %s46 = int_to_ptr.hbm [resolvable:$true] %s45
      %51 = dma.vmem_to_hbm [thread:$0]  %s44, 256, %s46, [#allocation4], 128, 128, 8
    $region13: #{tpu_custom_call.1} parent=1 // pred_fallthru
      _
    // Predicated region
    $region14: #{tpu_custom_call.1} parent=1 // pred_check
      _
    $region15: #{tpu_custom_call.1} parent=1 // pred_check_branch
      %53 = sbr.rel (0) target = $region17
    $region16: #{tpu_custom_call.1} parent=1 // pred_region
      %55 = dma.done [#allocation4], 256
    $region17: #{tpu_custom_call.1} parent=1 // pred_fallthru
      _
    %56 = vsyncpa [#allocation3], 1
    %57 = vsyncpa [#allocation4], 1

</llo_original>
